<compile_context>
chip_gen: v7x
topology: tpu7x:2x2x1
jax: 0.10.0
libtpu: 0.0.40
codegen_flags: <defaults>
</compile_context>

<pallas_src>
import functools

import jax
import jax.numpy as jnp
from jax.experimental import pallas as pl
from jax.experimental.pallas import tpu as pltpu

SIZES = (16, 32, 32, 4)       # sizes[0]=obs_dim, hidden..., sizes[-1]=act_dim
NUM_HEADS = 7
BATCH = 8
TILE_B = 8                    # batch tile (sublane aligned)
LANES = 128                   # lane-dense padded head-output width

D0, H1, H2, O = SIZES
KO = NUM_HEADS * O            # 28 (< 128, hence padding)

# ---- packed parameter-slab row layout (each section starts on an 8-row
# ---- boundary so in-kernel sub-views never straddle sublane tiles oddly).
_R_W1 = 0                                  # rows [0,16)   cols [0,H1)
_R_B1 = _R_W1 + ((D0 + 7) // 8) * 8        # 16            cols [0,H1)
_R_W2 = _R_B1 + 8                          # 24 rows [24,56) cols [0,H2)
_R_B2 = _R_W2 + ((H1 + 7) // 8) * 8        # 56            cols [0,H2)
_R_CW = _R_B2 + 8                          # 64 rows [64,96) cols [0,LANES)
_R_CB = _R_CW + ((H2 + 7) // 8) * 8        # 96            cols [0,LANES)
_SLAB_ROWS = _R_CB + 8                     # 104 (multiple of 8)


def _fused_kernel(obs_ref, slab_ref, out_ref):
    """Trunk (Linear-tanh-Linear-tanh) + all K folded heads, one batch tile."""
    x = obs_ref[...]                                   # [TILE_B, D0]
    w1 = slab_ref[_R_W1:_R_W1 + D0, 0:H1]              # [D0, H1]
    b1 = slab_ref[_R_B1:_R_B1 + 1, 0:H1]               # [1, H1]
    w2 = slab_ref[_R_W2:_R_W2 + H1, 0:H2]              # [H1, H2]
    b2 = slab_ref[_R_B2:_R_B2 + 1, 0:H2]               # [1, H2]
    cw = slab_ref[_R_CW:_R_CW + H2, :]                 # [H2, LANES]
    cb = slab_ref[_R_CB:_R_CB + 1, :]                  # [1, LANES]

    h = jnp.tanh(jnp.dot(x, w1, preferred_element_type=jnp.float32) + b1)
    feat = jnp.tanh(jnp.dot(h, w2, preferred_element_type=jnp.float32) + b2)
    # All K heads (main + prior pre-folded) in one [TB,H2] @ [H2,128] matmul;
    # single unmasked lane-dense store.
    out_ref[...] = jnp.dot(feat, cw, preferred_element_type=jnp.float32) + cb


def pack_params(params):
    """One-time parameter preprocessing (hoisted off the forward path).

    Folds the prior heads into the main heads (shared trunk), flattens the
    stacked head weights to a [H2, K*O] slab, zero-pads everything to 128
    lanes, and concatenates all parameters into a single [_SLAB_ROWS, 128]
    f32 array -> exactly one weight DMA per pallas_call.
    """
    w1, b1, w2, b2, hw, hb, pw, pb = params
    K = hw.shape[0]
    cw = (hw + pw).transpose(1, 0, 2).reshape(H2, K * O)   # col = k*O + o
    cb = (hb + pb).reshape(K * O)

    slab = jnp.zeros((_SLAB_ROWS, LANES), jnp.float32)
    slab = slab.at[_R_W1:_R_W1 + D0, :H1].set(w1)
    slab = slab.at[_R_B1, :H1].set(b1.reshape(H1))
    slab = slab.at[_R_W2:_R_W2 + H1, :H2].set(w2)
    slab = slab.at[_R_B2, :H2].set(b2.reshape(H2))
    slab = slab.at[_R_CW:_R_CW + H2, :K * O].set(cw)
    slab = slab.at[_R_CB, :K * O].set(cb)
    return slab


@jax.jit
def mlp_prior_ensemble_forward(obs, slab):
    """obs: [B, D0] f32, slab: packed params -> [NUM_HEADS, B, O] f32."""
    B = obs.shape[0]
    B_pad = ((B + TILE_B - 1) // TILE_B) * TILE_B
    if B_pad != B:
        obs = jnp.pad(obs, ((0, B_pad - B), (0, 0)))

    grid = (B_pad // TILE_B,)
    flops = 2 * B_pad * (D0 * H1 + H1 * H2 + H2 * LANES)
    transcendentals = B_pad * (H1 + H2)
    bytes_accessed = 4 * (B_pad * D0 + _SLAB_ROWS * LANES + B_pad * LANES)

    out_flat = pl.pallas_call(
        _fused_kernel,
        out_shape=jax.ShapeDtypeStruct((B_pad, LANES), jnp.float32),
        grid=grid,
        in_specs=[
            pl.BlockSpec((TILE_B, D0), lambda i: (i, 0),
                         memory_space=pltpu.MemorySpace.VMEM),
            # Constant index_map: parameter slab stays VMEM-resident across
            # all batch grid steps (fetched once).
            pl.BlockSpec((_SLAB_ROWS, LANES), lambda i: (0, 0),
                         memory_space=pltpu.MemorySpace.VMEM),
        ],
        out_specs=pl.BlockSpec((TILE_B, LANES), lambda i: (i, 0),
                               memory_space=pltpu.MemorySpace.VMEM),
        compiler_params=pltpu.CompilerParams(
            dimension_semantics=("parallel",)),
        cost_estimate=pl.CostEstimate(
            flops=flops,
            transcendentals=transcendentals,
            bytes_accessed=bytes_accessed),
    )(obs, slab)

    # Layout plumbing back to [K, B, O] outside the kernel.
    out = out_flat[:B, :KO]
    return out.reshape(B, NUM_HEADS, O).transpose(1, 0, 2)


def _reference(obs, params):
    w1, b1, w2, b2, hw, hb, pw, pb = params
    feat = jnp.tanh(jnp.tanh(obs @ w1 + b1) @ w2 + b2)
    main = jnp.einsum("bh,khd->kbd", feat, hw) + hb
    prior = jnp.einsum("bh,khd->kbd", feat, pw) + pb
    return main + prior


if __name__ == "__main__":
    key = jax.random.PRNGKey(0)
    keys = jax.random.split(key, 9)

    def linear_init(k, fan_in, shape):
        # Mimics torch nn.Linear default: U(-1/sqrt(fan_in), 1/sqrt(fan_in)).
        # Layout is [in, out] with x @ W (transpose of torch's [out, in]).
        bound = 1.0 / float(fan_in) ** 0.5
        return jax.random.uniform(k, shape, jnp.float32, -bound, bound)

    w1 = linear_init(keys[0], D0, (D0, H1))
    b1 = linear_init(keys[1], D0, (1, H1))
    w2 = linear_init(keys[2], H1, (H1, H2))
    b2 = linear_init(keys[3], H1, (1, H2))
    hw = linear_init(keys[4], H2, (NUM_HEADS, H2, O))
    hb = linear_init(keys[5], H2, (NUM_HEADS, 1, O))
    pw = linear_init(keys[6], H2, (NUM_HEADS, H2, O))
    pb = linear_init(keys[7], H2, (NUM_HEADS, 1, O))
    obs = jax.random.normal(keys[8], (BATCH, D0), jnp.float32)

    params = (w1, b1, w2, b2, hw, hb, pw, pb)

    # One-time parameter packing (not on the per-forward critical path).
    slab = jax.block_until_ready(pack_params(params))

    out = mlp_prior_ensemble_forward(obs, slab)
    out = jax.block_until_ready(out)

    ref = _reference(obs, params)
    assert out.shape == (NUM_HEADS, BATCH, O), out.shape
    # Folding (hw+pw) before the matmul reassociates the FP sum; error ~1e-6,
    # well within tolerance.
    assert jnp.allclose(out, ref, atol=1e-5, rtol=1e-5), float(
        jnp.max(jnp.abs(out - ref)))
    print("KERNEL_OK")
</pallas_src>

<mosaic_0001>
module attributes {stable_mosaic.version = 11 : i64} {
  func.func @_fused_kernel(%arg0: i32, %arg1: memref<8x16xf32, #tpu.memory_space<vmem>>, %arg2: memref<104x128xf32, #tpu.memory_space<vmem>>, %arg3: memref<8x128xf32, #tpu.memory_space<vmem>>) attributes {dimension_semantics = [#tpu.dimension_semantics<parallel>], iteration_bounds = array<i64: 1>, scalar_prefetch = 0 : i64, scratch_operands = 0 : i64, tpu.core_type = #tpu.core_type<tc>, window_params = [{transform_indices = @transform_0, window_bounds = array<i64: 8, 16>}, {pipeline_mode = #tpu.pipeline_mode<synchronous>, transform_indices = @transform_1, window_bounds = array<i64: 104, 128>}, {transform_indices = @transform_2, window_bounds = array<i64: 8, 128>}]} {
    %c0 = arith.constant 0 : index
    %c0_0 = arith.constant 0 : index
    %0 = vector.load %arg1[%c0, %c0_0] : memref<8x16xf32, #tpu.memory_space<vmem>>, vector<8x16xf32>
    %c0_1 = arith.constant 0 : index
    %c0_2 = arith.constant 0 : index
    %1 = vector.load %arg2[%c0_1, %c0_2] : memref<104x128xf32, #tpu.memory_space<vmem>>, vector<16x32xf32>
    %c16 = arith.constant 16 : index
    %c0_3 = arith.constant 0 : index
    %2 = vector.load %arg2[%c16, %c0_3] : memref<104x128xf32, #tpu.memory_space<vmem>>, vector<1x32xf32>
    %c24 = arith.constant 24 : index
    %c0_4 = arith.constant 0 : index
    %3 = vector.load %arg2[%c24, %c0_4] : memref<104x128xf32, #tpu.memory_space<vmem>>, vector<32x32xf32>
    %c56 = arith.constant 56 : index
    %c0_5 = arith.constant 0 : index
    %4 = vector.load %arg2[%c56, %c0_5] : memref<104x128xf32, #tpu.memory_space<vmem>>, vector<1x32xf32>
    %c64 = arith.constant 64 : index
    %c0_6 = arith.constant 0 : index
    %5 = vector.load %arg2[%c64, %c0_6] : memref<104x128xf32, #tpu.memory_space<vmem>>, vector<32x128xf32>
    %c96 = arith.constant 96 : index
    %c0_7 = arith.constant 0 : index
    %6 = vector.load %arg2[%c96, %c0_7] : memref<104x128xf32, #tpu.memory_space<vmem>>, vector<1x128xf32>
    %cst = arith.constant dense<0.000000e+00> : vector<8x32xf32>
    %7 = tpu.matmul %0, %1, %cst {dimension_numbers = #tpu.dot_dimension_numbers<[1], [0], [0], [1], [0, 0, 1, 1], [], []>} : vector<8x16xf32>, vector<16x32xf32>, vector<8x32xf32> -> vector<8x32xf32>
    %8 = vector.broadcast %2 : vector<1x32xf32> to vector<8x32xf32>
    %9 = arith.addf %7, %8 : vector<8x32xf32>
    %10 = math.tanh %9 : vector<8x32xf32>
    %cst_8 = arith.constant dense<0.000000e+00> : vector<8x32xf32>
    %11 = tpu.matmul %10, %3, %cst_8 {dimension_numbers = #tpu.dot_dimension_numbers<[1], [0], [0], [1], [0, 0, 1, 1], [], []>} : vector<8x32xf32>, vector<32x32xf32>, vector<8x32xf32> -> vector<8x32xf32>
    %12 = vector.broadcast %4 : vector<1x32xf32> to vector<8x32xf32>
    %13 = arith.addf %11, %12 : vector<8x32xf32>
    %14 = math.tanh %13 : vector<8x32xf32>
    %cst_9 = arith.constant dense<0.000000e+00> : vector<8x128xf32>
    %15 = tpu.matmul %14, %5, %cst_9 {dimension_numbers = #tpu.dot_dimension_numbers<[1], [0], [0], [1], [0, 0, 1, 1], [], []>} : vector<8x32xf32>, vector<32x128xf32>, vector<8x128xf32> -> vector<8x128xf32>
    %16 = vector.broadcast %6 : vector<1x128xf32> to vector<8x128xf32>
    %17 = arith.addf %15, %16 : vector<8x128xf32>
    %c0_10 = arith.constant 0 : index
    %c0_11 = arith.constant 0 : index
    %18 = vector.load %arg3[%c0_10, %c0_11] : memref<8x128xf32, #tpu.memory_space<vmem>>, vector<8x128xf32>
    tpu.vector_store %arg3[%c0_10, %c0_11], %17 {strides = array<i32>} : memref<8x128xf32, #tpu.memory_space<vmem>>, vector<8x128xf32>,
    return
  }
  func.func @transform_0(%arg0: i32) -> (i32, i32) {
    %c0_i32 = arith.constant 0 : i32
    %c0_i32_0 = arith.constant 0 : i32
    return %arg0, %c0_i32 : i32, i32
  }
  func.func @transform_1(%arg0: i32) -> (i32, i32) {
    %c0_i32 = arith.constant 0 : i32
    %c0_i32_0 = arith.constant 0 : i32
    %c0_i32_1 = arith.constant 0 : i32
    return %c0_i32, %c0_i32_0 : i32, i32
  }
  func.func @transform_2(%arg0: i32) -> (i32, i32) {
    %c0_i32 = arith.constant 0 : i32
    %c0_i32_0 = arith.constant 0 : i32
    return %arg0, %c0_i32 : i32, i32
  }
}

</mosaic_0001>

<llo_original>
// kernel: mlp_prior_ensemble_forward.1
$region0: #{mlp_prior_ensemble_forward.1}
  #allocation0 [shape = 'u32[]', space=smem, size = 0x4, offset = 0x4, fixed_abs, tag = 'smem constant byte address 0x4 - core index']
  #allocation1 [shape = 'u32[144,128]{1,0:T(1,128)}', space=vmem, size = 0x12000, scoped, tag = 'internal scratch']
  %s0 = inlined_call_operand.hbm [shape: f32[8,16], index: 0, kind: input, shape index: {}]
  %s1 = inlined_call_operand.hbm [shape: f32[104,128], index: 1, kind: input, shape index: {}]
  %s2 = inlined_call_operand.vmem [shape: f32[8,128], index: 2, kind: output, shape index: {}]
  %s3 = sld [smem:[#allocation0]]
  $region26: #{mlp_prior_ensemble_forward.1} parent=0
    _
  %s5 = ssub.s32 1, %s3
  %s6 = scalar_select 0, %s5, %s3
  $region1: #{mlp_prior_ensemble_forward.1} parent=0
    #allocation2 [shape = 'u8[4096]{0}', space=vmem, size = 0x1000, scoped, tag = 'input window, operand 0, single buffered']
    #allocation3 [shape = 's32[1]{0}', space=sflag, size = 0x4, scoped, tag = 'scoped memory for mlp_prior_ensemble_forward.1']
    #allocation4 [shape = 'u8[53248]{0}', space=vmem, size = 0xd000, scoped, tag = 'input window, operand 1, single buffered']
    #allocation5 [shape = 's32[1]{0}', space=sflag, size = 0x4, scoped, tag = 'scoped memory for mlp_prior_ensemble_forward.1']
    %7 = vsyncpa [#allocation3], 0
    %8 = vsyncpa [#allocation5], 0
    // Predicated region
    $region2: #{mlp_prior_ensemble_forward.1} parent=1 // pred_check
      _
    $region3: #{mlp_prior_ensemble_forward.1} parent=1 // pred_check_branch
      %10 = sbr.rel (0) target = $region5
    $region4: #{mlp_prior_ensemble_forward.1} parent=1 // pred_region
      %s12 = ssub.s32 128, 128
      %13 = vsyncadd [#allocation3], %s12
      %s15 = sshll.u32 [#allocation2], 4
      %s16 = int_to_ptr.vmem [resolvable:$true] %s15
      %18 = dma.hbm_to_vmem [thread:$0]  %s0, 128, %s16, [#allocation3]
    $region5: #{mlp_prior_ensemble_forward.1} parent=1 // pred_fallthru
      _
    // Predicated region
    $region6: #{mlp_prior_ensemble_forward.1} parent=1 // pred_check
      _
    $region7: #{mlp_prior_ensemble_forward.1} parent=1 // pred_check_branch
      %20 = sbr.rel (0) target = $region9
    $region8: #{mlp_prior_ensemble_forward.1} parent=1 // pred_region
      %s22 = ssub.s32 1664, 1664
      %23 = vsyncadd [#allocation5], %s22
      %s24 = sshll.u32 [#allocation4], 4
      %s25 = int_to_ptr.vmem [resolvable:$true] %s24
      %30 = dma.hbm_to_vmem [thread:$0]  %s1, 1664, %s25, [#allocation5], 128, 128, 8
    $region9: #{mlp_prior_ensemble_forward.1} parent=1 // pred_fallthru
      _
    // Predicated region
    $region10: #{mlp_prior_ensemble_forward.1} parent=1 // pred_check
      _
    $region11: #{mlp_prior_ensemble_forward.1} parent=1 // pred_check_branch
      %32 = sbr.rel (0) target = $region13
    $region12: #{mlp_prior_ensemble_forward.1} parent=1 // pred_region
      %33 = dma.done [#allocation3], 128
    $region13: #{mlp_prior_ensemble_forward.1} parent=1 // pred_fallthru
      _
    // Predicated region
    $region14: #{mlp_prior_ensemble_forward.1} parent=1 // pred_check
      _
    $region15: #{mlp_prior_ensemble_forward.1} parent=1 // pred_check_branch
      %35 = sbr.rel (0) target = $region17
    $region16: #{mlp_prior_ensemble_forward.1} parent=1 // pred_region
      %36 = dma.done [#allocation5], 1664
    $region17: #{mlp_prior_ensemble_forward.1} parent=1 // pred_fallthru
      _
    %v37 = vld [vmem:[#allocation2] sm:$0xff]
    %v38 = vld [vmem:[#allocation4] sm:$0xff]
    %v39 = vld [vmem:[#allocation4 + $0x8] sm:$0xff]
    %v40 = vld [vmem:[#allocation4 + $0x10] sm:$0x1]
    %v41 = vld [vmem:[#allocation4 + $0x18] sm:$0xff]
    %v42 = vld [vmem:[#allocation4 + $0x20] sm:$0xff]
    %v43 = vld [vmem:[#allocation4 + $0x28] sm:$0xff]
    %v44 = vld [vmem:[#allocation4 + $0x30] sm:$0xff]
    %v45 = vld [vmem:[#allocation4 + $0x38] sm:$0x1]
    %v46 = vld [vmem:[#allocation4 + $0x40] sm:$0xff]
    %v47 = vld [vmem:[#allocation4 + $0x48] sm:$0xff]
    %v48 = vld [vmem:[#allocation4 + $0x50] sm:$0xff]
    %v49 = vld [vmem:[#allocation4 + $0x58] sm:$0xff]
    %v50 = vld [vmem:[#allocation4 + $0x60] sm:$0x1]
    %v51 = vlaneseq
    %v52 = vshrl.u32 %v51, 7
    %v53 = vsub.s32 0, %v52
    %v54 = vrot.slane %v40, %v53
    %vm55 = vcmask 130048
    %v57 = vsel %vm55, %v37, 0
    %59 = vmatprep.subr.mxu0 0.0
    %60 = vmatpush1.msra.mxu0 %v38
    %61 = vmatprep.subr.mxu0 0.0
    %62 = vmatpush1.msra.mxu0 %v39
    %63 = vmatprep.subr.mxu0 0.0
    %64 = vmatpush1.msra.mxu0 0.0
    %65 = vmatprep.subr.mxu0 0.0
    %66 = vmatpush1.msra.mxu0 0.0
    %67 = vmatprep.subr.mxu0 0.0
    %68 = vmatpush1.msra.mxu0 0.0
    %69 = vmatprep.subr.mxu0 0.0
    %70 = vmatpush1.msra.mxu0 0.0
    %71 = vmatprep.subr.mxu0 0.0
    %72 = vmatpush1.msra.mxu0 0.0
    %73 = vmatprep.subr.mxu0 0.0
    %74 = vmatpush1.msra.mxu0 0.0
    %75 = vmatprep.subr.mxu0 0.0
    %76 = vmatpush1.msra.mxu0 0.0
    %77 = vmatprep.subr.mxu0 0.0
    %78 = vmatpush1.msra.mxu0 0.0
    %79 = vmatprep.subr.mxu0 0.0
    %80 = vmatpush1.msra.mxu0 0.0
    %81 = vmatprep.subr.mxu0 0.0
    %82 = vmatpush1.msra.mxu0 0.0
    %83 = vmatprep.subr.mxu0 0.0
    %84 = vmatpush1.msra.mxu0 0.0
    %85 = vmatprep.subr.mxu0 0.0
    %86 = vmatpush1.msra.mxu0 0.0
    %87 = vmatprep.subr.mxu0 0.0
    %88 = vmatpush1.msra.mxu0 0.0
    %89 = vmatprep.subr.mxu0 0.0
    %90 = vmatpush1.msra.mxu0 0.0
    %91 = vmatprep.subr.mxu0 0.0
    %92 = vmatpush1.msra.mxu0 0.0
    %93 = vmatprep.subr.mxu0 0.0
    %94 = vmatpush1.msra.mxu0 0.0
    %95 = vmatprep.subr.mxu0 0.0
    %96 = vmatpush1.msra.mxu0 0.0
    %97 = vmatprep.subr.mxu0 0.0
    %98 = vmatpush1.msra.mxu0 0.0
    %99 = vmatprep.subr.mxu0 0.0
    %100 = vmatpush1.msra.mxu0 0.0
    %101 = vmatprep.subr.mxu0 0.0
    %102 = vmatpush1.msra.mxu0 0.0
    %103 = vmatprep.subr.mxu0 0.0
    %104 = vmatpush1.msra.mxu0 0.0
    %105 = vmatprep.subr.mxu0 0.0
    %106 = vmatpush1.msra.mxu0 0.0
    %107 = vmatprep.subr.mxu0 0.0
    %108 = vmatpush1.msra.mxu0 0.0
    %109 = vmatprep.subr.mxu0 0.0
    %110 = vmatpush1.msra.mxu0 0.0
    %111 = vmatprep.subr.mxu0 0.0
    %112 = vmatpush1.msra.mxu0 0.0
    %113 = vmatprep.subr.mxu0 0.0
    %114 = vmatpush1.msra.mxu0 0.0
    %115 = vmatprep.subr.mxu0 0.0
    %116 = vmatpush1.msra.mxu0 0.0
    %117 = vmatprep.subr.mxu0 0.0
    %118 = vmatpush1.msra.mxu0 0.0
    %119 = vmatprep.subr.mxu0 0.0
    %120 = vmatpush1.msra.mxu0 0.0
    %121 = vmatprep.subr.mxu0 0.0
    %122 = vmatpush1.msra.mxu0 0.0
    %123 = vmatprep.mubr.f32.mxu0 0.0
    %124 = vmatmul.mubr.f32.gmra.mrb[0].mxu0 %v57
    %v125 = vpop.f32.mrb[0].mxu0
    %v126 = vadd.f32 %v54, %v125
    %v127 = vpop.f32.mrb[0].mxu0
    %128 = vdwg.mxu0
    %v129 = vtanh.pop %v126
    %v130 = vlaneseq
    %v131 = vshrl.u32 %v130, 7
    %v132 = vsub.s32 0, %v131
    %v133 = vrot.slane %v45, %v132
    %vm134 = vcmask 261120
    %v136 = vsel %vm134, %v129, 0
    %138 = vmatprep.subr.mxu0 0.0
    %139 = vmatpush1.msra.mxu0 %v41
    %140 = vmatprep.subr.mxu0 0.0
    %141 = vmatpush1.msra.mxu0 %v42
    %142 = vmatprep.subr.mxu0 0.0
    %143 = vmatpush1.msra.mxu0 %v43
    %144 = vmatprep.subr.mxu0 0.0
    %145 = vmatpush1.msra.mxu0 %v44
    %146 = vmatprep.subr.mxu0 0.0
    %147 = vmatpush1.msra.mxu0 0.0
    %148 = vmatprep.subr.mxu0 0.0
    %149 = vmatpush1.msra.mxu0 0.0
    %150 = vmatprep.subr.mxu0 0.0
    %151 = vmatpush1.msra.mxu0 0.0
    %152 = vmatprep.subr.mxu0 0.0
    %153 = vmatpush1.msra.mxu0 0.0
    %154 = vmatprep.subr.mxu0 0.0
    %155 = vmatpush1.msra.mxu0 0.0
    %156 = vmatprep.subr.mxu0 0.0
    %157 = vmatpush1.msra.mxu0 0.0
    %158 = vmatprep.subr.mxu0 0.0
    %159 = vmatpush1.msra.mxu0 0.0
    %160 = vmatprep.subr.mxu0 0.0
    %161 = vmatpush1.msra.mxu0 0.0
    %162 = vmatprep.subr.mxu0 0.0
    %163 = vmatpush1.msra.mxu0 0.0
    %164 = vmatprep.subr.mxu0 0.0
    %165 = vmatpush1.msra.mxu0 0.0
    %166 = vmatprep.subr.mxu0 0.0
    %167 = vmatpush1.msra.mxu0 0.0
    %168 = vmatprep.subr.mxu0 0.0
    %169 = vmatpush1.msra.mxu0 0.0
    %170 = vmatprep.subr.mxu0 0.0
    %171 = vmatpush1.msra.mxu0 0.0
    %172 = vmatprep.subr.mxu0 0.0
    %173 = vmatpush1.msra.mxu0 0.0
    %174 = vmatprep.subr.mxu0 0.0
    %175 = vmatpush1.msra.mxu0 0.0
    %176 = vmatprep.subr.mxu0 0.0
    %177 = vmatpush1.msra.mxu0 0.0
    %178 = vmatprep.subr.mxu0 0.0
    %179 = vmatpush1.msra.mxu0 0.0
    %180 = vmatprep.subr.mxu0 0.0
    %181 = vmatpush1.msra.mxu0 0.0
    %182 = vmatprep.subr.mxu0 0.0
    %183 = vmatpush1.msra.mxu0 0.0
    %184 = vmatprep.subr.mxu0 0.0
    %185 = vmatpush1.msra.mxu0 0.0
    %186 = vmatprep.subr.mxu0 0.0
    %187 = vmatpush1.msra.mxu0 0.0
    %188 = vmatprep.subr.mxu0 0.0
    %189 = vmatpush1.msra.mxu0 0.0
    %190 = vmatprep.subr.mxu0 0.0
    %191 = vmatpush1.msra.mxu0 0.0
    %192 = vmatprep.subr.mxu0 0.0
    %193 = vmatpush1.msra.mxu0 0.0
    %194 = vmatprep.subr.mxu0 0.0
    %195 = vmatpush1.msra.mxu0 0.0
    %196 = vmatprep.subr.mxu0 0.0
    %197 = vmatpush1.msra.mxu0 0.0
    %198 = vmatprep.subr.mxu0 0.0
    %199 = vmatpush1.msra.mxu0 0.0
    %200 = vmatprep.subr.mxu0 0.0
    %201 = vmatpush1.msra.mxu0 0.0
    %202 = vmatprep.mubr.f32.mxu0 0.0
    %203 = vmatmul.mubr.f32.gmra.mrb[0].mxu0 %v136
    %v204 = vpop.f32.mrb[0].mxu0
    %v205 = vadd.f32 %v133, %v204
    %v206 = vpop.f32.mrb[0].mxu0
    %207 = vdwg.mxu0
    %v208 = vtanh.pop %v205
    %v209 = vlaneseq
    %v210 = vshrl.u32 %v209, 7
    %v211 = vsub.s32 0, %v210
    %v212 = vrot.slane %v50, %v211
    %v214 = vsel %vm134, %v208, 0
    %216 = vmatprep.subr.mxu0 0.0
    %217 = vmatpush1.msra.mxu0 %v46
    %218 = vmatprep.subr.mxu0 0.0
    %219 = vmatpush1.msra.mxu0 %v47
    %220 = vmatprep.subr.mxu0 0.0
    %221 = vmatpush1.msra.mxu0 %v48
    %222 = vmatprep.subr.mxu0 0.0
    %223 = vmatpush1.msra.mxu0 %v49
    %224 = vmatprep.subr.mxu0 0.0
    %225 = vmatpush1.msra.mxu0 0.0
    %226 = vmatprep.subr.mxu0 0.0
    %227 = vmatpush1.msra.mxu0 0.0
    %228 = vmatprep.subr.mxu0 0.0
    %229 = vmatpush1.msra.mxu0 0.0
    %230 = vmatprep.subr.mxu0 0.0
    %231 = vmatpush1.msra.mxu0 0.0
    %232 = vmatprep.subr.mxu0 0.0
    %233 = vmatpush1.msra.mxu0 0.0
    %234 = vmatprep.subr.mxu0 0.0
    %235 = vmatpush1.msra.mxu0 0.0
    %236 = vmatprep.subr.mxu0 0.0
    %237 = vmatpush1.msra.mxu0 0.0
    %238 = vmatprep.subr.mxu0 0.0
    %239 = vmatpush1.msra.mxu0 0.0
    %240 = vmatprep.subr.mxu0 0.0
    %241 = vmatpush1.msra.mxu0 0.0
    %242 = vmatprep.subr.mxu0 0.0
    %243 = vmatpush1.msra.mxu0 0.0
    %244 = vmatprep.subr.mxu0 0.0
    %245 = vmatpush1.msra.mxu0 0.0
    %246 = vmatprep.subr.mxu0 0.0
    %247 = vmatpush1.msra.mxu0 0.0
    %248 = vmatprep.subr.mxu0 0.0
    %249 = vmatpush1.msra.mxu0 0.0
    %250 = vmatprep.subr.mxu0 0.0
    %251 = vmatpush1.msra.mxu0 0.0
    %252 = vmatprep.subr.mxu0 0.0
    %253 = vmatpush1.msra.mxu0 0.0
    %254 = vmatprep.subr.mxu0 0.0
    %255 = vmatpush1.msra.mxu0 0.0
    %256 = vmatprep.subr.mxu0 0.0
    %257 = vmatpush1.msra.mxu0 0.0
    %258 = vmatprep.subr.mxu0 0.0
    %259 = vmatpush1.msra.mxu0 0.0
    %260 = vmatprep.subr.mxu0 0.0
    %261 = vmatpush1.msra.mxu0 0.0
    %262 = vmatprep.subr.mxu0 0.0
    %263 = vmatpush1.msra.mxu0 0.0
    %264 = vmatprep.subr.mxu0 0.0
    %265 = vmatpush1.msra.mxu0 0.0
    %266 = vmatprep.subr.mxu0 0.0
    %267 = vmatpush1.msra.mxu0 0.0
    %268 = vmatprep.subr.mxu0 0.0
    %269 = vmatpush1.msra.mxu0 0.0
    %270 = vmatprep.subr.mxu0 0.0
    %271 = vmatpush1.msra.mxu0 0.0
    %272 = vmatprep.subr.mxu0 0.0
    %273 = vmatpush1.msra.mxu0 0.0
    %274 = vmatprep.subr.mxu0 0.0
    %275 = vmatpush1.msra.mxu0 0.0
    %276 = vmatprep.subr.mxu0 0.0
    %277 = vmatpush1.msra.mxu0 0.0
    %278 = vmatprep.subr.mxu0 0.0
    %279 = vmatpush1.msra.mxu0 0.0
    %280 = vmatprep.mubr.f32.mxu0 0.0
    %281 = vmatmul.mubr.f32.gmra.mrb[0].mxu0 %v214
    %v282 = vpop.f32.mrb[0].mxu0
    %v283 = vadd.f32 %v212, %v282
    %v284 = vpop.f32.mrb[0].mxu0
    %285 = vdwg.mxu0
    %286 = vst [vmem:[%s2] sm:$0xff] %v283
    // Predicated region
    $region18: #{mlp_prior_ensemble_forward.1} parent=1 // pred_check
      _
    $region19: #{mlp_prior_ensemble_forward.1} parent=1 // pred_check_branch
      %288 = sbr.rel (0) target = $region21
    $region20: #{mlp_prior_ensemble_forward.1} parent=1 // pred_region
      _
    $region21: #{mlp_prior_ensemble_forward.1} parent=1 // pred_fallthru
      _
    // Predicated region
    $region22: #{mlp_prior_ensemble_forward.1} parent=1 // pred_check
      _
    $region23: #{mlp_prior_ensemble_forward.1} parent=1 // pred_check_branch
      %290 = sbr.rel (0) target = $region25
    $region24: #{mlp_prior_ensemble_forward.1} parent=1 // pred_region
      _
    $region25: #{mlp_prior_ensemble_forward.1} parent=1 // pred_fallthru
      _
    %291 = vsyncpa [#allocation3], 1
    %292 = vsyncpa [#allocation5], 1

</llo_original>
